<compile_context>
chip_gen: v7x
topology: tpu7x:2x2x1
jax: 0.10.0
libtpu: 0.0.40
codegen_flags: <defaults>
</compile_context>

<pallas_src>
import functools

import jax
import jax.numpy as jnp
import numpy as np
from jax import lax
from jax.experimental import pallas as pl
from jax.experimental.pallas import tpu as pltpu


def _cdiv(a, b):
    return -(-a // b)


def _round_up(a, m):
    return _cdiv(a, m) * m


def _dpsh_loss_kernel(ynorm_ref, u_ref, y_ref, Ut_ref, Yt_ref, out_ref,
                      acc_ref, *, alpha, gamma, q, n_valid, tn, needs_mask):
    c = pl.program_id(0)            # parallel half (TensorCore on v7x)
    j = pl.program_id(1)            # tile index within this half
    nj = pl.num_programs(1)

    @pl.when(j == 0)
    def _():
        acc_ref[...] = jnp.zeros_like(acc_ref)

    u = u_ref[...]                  # (B, bit)  -- already normalized u/(|u|+1)
    y = y_ref[...]                  # (B, C)
    Ut = Yt = None
    Ut = Ut_ref[...]                # (bit, tn) -- transposed U tile
    Yt = Yt_ref[...]                # (C, tn)   -- transposed Y tile

    # s = y @ Y_tile : (B, C) @ (C, tn) -> (B, tn), MXU-native.
    s = lax.dot_general(y, Yt, (((1,), (0,)), ((), ())),
                        preferred_element_type=jnp.float32)

    # Row norms (B,1) precomputed in the wrapper; column norms lane-dense (1, tn).
    Ynorm = jnp.sqrt(jnp.sum(Yt * Yt, axis=0, keepdims=True))       # (1, tn)
    norm = ynorm_ref[...] * Ynorm                                   # (B, tn), VPU
    s = s / (norm + 1e-5)

    M = (s > 0.99).astype(jnp.float32) + (s < 0.01).astype(jnp.float32)

    # inner_product = alpha * u @ U_tile : (B, bit) @ (bit, tn) -> (B, tn)
    ip = alpha * lax.dot_general(u, Ut, (((1,), (0,)), ((), ())),
                                 preferred_element_type=jnp.float32)

    log_loss = jnp.log1p(jnp.exp(-jnp.abs(ip))) + jnp.maximum(ip, 0.0) - s * ip
    mse_loss = (ip + q - 2.0 * s * q) ** 2
    contrib = M * log_loss + gamma * (1.0 - M) * mse_loss            # (B, tn)

    if needs_mask:
        # Zero out columns that are padding past the true num_train.
        col0 = (c * nj + j) * tn
        col = col0 + lax.broadcasted_iota(jnp.int32, contrib.shape, 1)
        contrib = jnp.where(col < n_valid, contrib, 0.0)

    acc_ref[...] += contrib

    @pl.when(j == nj - 1)
    def _():
        total = jnp.sum(acc_ref[...])
        out_ref[...] = jnp.broadcast_to(total, out_ref.shape).astype(jnp.float32)


def dpsh_loss(u, y, ind, U_T, Y_T, *, alpha, gamma, lam, q,
              tn=8192, num_parallel=2):
    """DPSH loss forward.

    State buffers are kept transposed relative to the PyTorch module:
      U_T : (bit, num_train), Y_T : (n_class, num_train)
    Returns (loss, updated_U_T, updated_Y_T) -- same semantics as
    DPSHLoss.forward (loss value + in-place state update), just a different
    storage layout for the persistent buffers.
    """
    u = u.astype(jnp.float32)
    y = y.astype(jnp.float32)
    u_norm = u / (jnp.abs(u) + 1.0)

    # State update (glue): self.U[ind,:] = u ; self.Y[ind,:] = y (transposed).
    U_T = U_T.at[:, ind].set(u_norm.T)
    Y_T = Y_T.at[:, ind].set(y.T)

    B, bit = u.shape
    C = y.shape[1]
    N = U_T.shape[1]

    # Tile-size selection: large lane-dense tiles, minimal padding.
    per_core = _cdiv(N, num_parallel)
    tn_cap = min(_round_up(int(tn), 128), _round_up(per_core, 128))
    nj = _cdiv(per_core, tn_cap)
    tn_eff = _round_up(_cdiv(per_core, nj), 128)
    Npad = num_parallel * nj * tn_eff
    needs_mask = Npad != N

    U_in = U_T if not needs_mask else jnp.pad(U_T, ((0, 0), (0, Npad - N)))
    Y_in = Y_T if not needs_mask else jnp.pad(Y_T, ((0, 0), (0, Npad - N)))

    # Hoisted: row norms of y (resident across the whole grid).
    ynorm = jnp.sqrt(jnp.sum(y * y, axis=1, keepdims=True))          # (B, 1)

    kernel = functools.partial(
        _dpsh_loss_kernel,
        alpha=float(alpha), gamma=float(gamma), q=float(q),
        n_valid=N, tn=tn_eff, needs_mask=needs_mask)

    out = pl.pallas_call(
        kernel,
        out_shape=jax.ShapeDtypeStruct((num_parallel, 8, 128), jnp.float32),
        grid_spec=pltpu.PrefetchScalarGridSpec(
            num_scalar_prefetch=0,
            grid=(num_parallel, nj),
            in_specs=[
                pl.BlockSpec((B, 1), lambda c, j: (0, 0)),        # ynorm
                pl.BlockSpec((B, bit), lambda c, j: (0, 0)),      # u (resident)
                pl.BlockSpec((B, C), lambda c, j: (0, 0)),        # y (resident)
                pl.BlockSpec((bit, tn_eff),
                             lambda c, j: (0, c * nj + j)),       # U^T tile
                pl.BlockSpec((C, tn_eff),
                             lambda c, j: (0, c * nj + j)),       # Y^T tile
            ],
            out_specs=pl.BlockSpec((1, 8, 128), lambda c, j: (c, 0, 0)),
            scratch_shapes=[pltpu.VMEM((B, tn_eff), jnp.float32)],
        ),
        compiler_params=pltpu.CompilerParams(
            dimension_semantics=("parallel", "arbitrary")),
    )(ynorm, u_norm, y, U_in, Y_in)

    loss1 = jnp.sum(out[:, 0, 0]) / (B * N)
    loss2 = lam * jnp.mean(jnp.abs(jnp.abs(u_norm) - 1.0))
    return loss1 + loss2, U_T, Y_T


def dpsh_loss_ref(u, y, ind, U, Y, *, alpha, gamma, lam, q):
    """Pure-JAX reference of the PyTorch forward (standard (N, .) layout)."""
    u = u.astype(jnp.float32)
    y = y.astype(jnp.float32)
    u = u / (jnp.abs(u) + 1.0)
    U = U.at[ind].set(u)
    Y = Y.at[ind].set(y)
    s = y @ Y.T
    norm = (jnp.sqrt((y ** 2).sum(1, keepdims=True)) @
            jnp.sqrt((Y ** 2).sum(1, keepdims=True)).T)
    s = s / (norm + 1e-5)
    M = (s > 0.99).astype(jnp.float32) + (s < 0.01).astype(jnp.float32)
    ip = alpha * (u @ U.T)
    log_loss = jnp.log1p(jnp.exp(-jnp.abs(ip))) + jnp.maximum(ip, 0.0) - s * ip
    mse = (ip + q - 2.0 * s * q) ** 2
    loss1 = jnp.mean(M * log_loss + gamma * (1.0 - M) * mse)
    loss2 = lam * jnp.mean(jnp.abs(jnp.abs(u) - 1.0))
    return loss1 + loss2, U, Y


if __name__ == "__main__":
    # config: num_train=320 (exercises the remainder/mask path),
    #         n_class=16, bit=32, batch=8
    B, BIT, C, N = 8, 32, 16, 320
    alpha, gamma, lam = 0.5, 0.1, 0.1

    key = jax.random.PRNGKey(0)
    k_u, k_y, k_U, k_Y = jax.random.split(key, 4)

    u = jax.random.normal(k_u, (B, BIT), jnp.float32)
    y = jax.random.bernoulli(k_y, 0.3, (B, C)).astype(jnp.float32)
    ind = jnp.arange(B, dtype=jnp.int32) * 13      # distinct rows in [0, N)

    # Module state buffers (zeros per __init__); deterministically pre-filled
    # to emulate earlier minibatch updates so both loss branches are hit.
    U0 = jax.random.normal(k_U, (N, BIT), jnp.float32)
    U0 = U0 / (jnp.abs(U0) + 1.0)
    Y0 = jax.random.bernoulli(k_Y, 0.3, (N, C)).astype(jnp.float32)

    # Kernel keeps the state transposed.
    loss, U_T_new, Y_T_new = dpsh_loss(u, y, ind, U0.T, Y0.T,
                                       alpha=alpha, gamma=gamma, lam=lam,
                                       q=BIT)
    loss = jax.block_until_ready(loss)

    ref_loss, U_ref, Y_ref = dpsh_loss_ref(u, y, ind, U0, Y0,
                                           alpha=alpha, gamma=gamma,
                                           lam=lam, q=BIT)
    ref_loss = jax.block_until_ready(ref_loss)

    np.testing.assert_allclose(np.asarray(loss), np.asarray(ref_loss),
                               rtol=2e-3, atol=2e-3)
    np.testing.assert_allclose(np.asarray(U_T_new.T), np.asarray(U_ref),
                               rtol=1e-6, atol=1e-6)
    np.testing.assert_allclose(np.asarray(Y_T_new.T), np.asarray(Y_ref),
                               rtol=1e-6, atol=1e-6)
    print("KERNEL_OK")
</pallas_src>

<mosaic_0001>
module attributes {stable_mosaic.version = 11 : i64} {
  func.func @_dpsh_loss_kernel(%arg0: i32, %arg1: i32, %arg2: memref<8x1xf32, #tpu.memory_space<vmem>>, %arg3: memref<8x32xf32, #tpu.memory_space<vmem>>, %arg4: memref<8x16xf32, #tpu.memory_space<vmem>>, %arg5: memref<32x256xf32, #tpu.memory_space<vmem>>, %arg6: memref<16x256xf32, #tpu.memory_space<vmem>>, %arg7: memref<1x8x128xf32, #tpu.memory_space<vmem>>, %arg8: memref<8x256xf32, #tpu.memory_space<vmem>>) attributes {dimension_semantics = [#tpu.dimension_semantics<parallel>, #tpu.dimension_semantics<arbitrary>], iteration_bounds = array<i64: 2, 1>, scalar_prefetch = 0 : i64, scratch_operands = 1 : i64, tpu.core_type = #tpu.core_type<tc>, window_params = [{pipeline_mode = #tpu.pipeline_mode<synchronous>, transform_indices = @transform_0, window_bounds = array<i64: 8, 1>}, {pipeline_mode = #tpu.pipeline_mode<synchronous>, transform_indices = @transform_1, window_bounds = array<i64: 8, 32>}, {pipeline_mode = #tpu.pipeline_mode<synchronous>, transform_indices = @transform_2, window_bounds = array<i64: 8, 16>}, {transform_indices = @transform_3, window_bounds = array<i64: 32, 256>}, {transform_indices = @transform_4, window_bounds = array<i64: 16, 256>}, {transform_indices = @transform_5, window_bounds = array<i64: 1, 8, 128>}]} {
    %c0_i32 = arith.constant 0 : i32
    %0 = arith.cmpi eq, %arg1, %c0_i32 : i32
    %1 = arith.extui %0 : i1 to i32
    %c0_i32_0 = arith.constant 0 : i32
    %2 = arith.cmpi ne, %1, %c0_i32_0 : i32
    scf.if %2 {
      %cst_30 = arith.constant 0.000000e+00 : f32
      %72 = vector.broadcast %cst_30 : f32 to vector<8x256xf32>
      %c0_31 = arith.constant 0 : index
      %c0_32 = arith.constant 0 : index
      %73 = vector.load %arg8[%c0_31, %c0_32] : memref<8x256xf32, #tpu.memory_space<vmem>>, vector<8x256xf32>
      tpu.vector_store %arg8[%c0_31, %c0_32], %72 {strides = array<i32>} : memref<8x256xf32, #tpu.memory_space<vmem>>, vector<8x256xf32>,
    } else {
    }
    %c0 = arith.constant 0 : index
    %c0_1 = arith.constant 0 : index
    %3 = vector.load %arg3[%c0, %c0_1] : memref<8x32xf32, #tpu.memory_space<vmem>>, vector<8x32xf32>
    %c0_2 = arith.constant 0 : index
    %c0_3 = arith.constant 0 : index
    %4 = vector.load %arg4[%c0_2, %c0_3] : memref<8x16xf32, #tpu.memory_space<vmem>>, vector<8x16xf32>
    %c0_4 = arith.constant 0 : index
    %c0_5 = arith.constant 0 : index
    %5 = vector.load %arg5[%c0_4, %c0_5] : memref<32x256xf32, #tpu.memory_space<vmem>>, vector<32x256xf32>
    %c0_6 = arith.constant 0 : index
    %c0_7 = arith.constant 0 : index
    %6 = vector.load %arg6[%c0_6, %c0_7] : memref<16x256xf32, #tpu.memory_space<vmem>>, vector<16x256xf32>
    %cst = arith.constant dense<0.000000e+00> : vector<8x256xf32>
    %7 = tpu.matmul %4, %6, %cst {dimension_numbers = #tpu.dot_dimension_numbers<[1], [0], [0], [1], [0, 0, 1, 1], [], []>} : vector<8x16xf32>, vector<16x256xf32>, vector<8x256xf32> -> vector<8x256xf32>
    %8 = arith.mulf %6, %6 : vector<16x256xf32>
    %cst_8 = arith.constant dense<0.000000e+00> : vector<256xf32>
    %9 = vector.multi_reduction <add>, %8, %cst_8 [0] : vector<16x256xf32> to vector<256xf32>
    %10 = vector.shape_cast %9 : vector<256xf32> to vector<1x256xf32>
    %11 = math.sqrt %10 : vector<1x256xf32>
    %c0_9 = arith.constant 0 : index
    %c0_10 = arith.constant 0 : index
    %12 = vector.load %arg2[%c0_9, %c0_10] : memref<8x1xf32, #tpu.memory_space<vmem>>, vector<8x1xf32>
    %13 = vector.broadcast %12 : vector<8x1xf32> to vector<8x256xf32>
    %14 = vector.broadcast %11 : vector<1x256xf32> to vector<8x256xf32>
    %15 = arith.mulf %13, %14 : vector<8x256xf32>
    %cst_11 = arith.constant 9.99999974E-6 : f32
    %16 = vector.broadcast %cst_11 : f32 to vector<8x256xf32>
    %17 = arith.addf %15, %16 : vector<8x256xf32>
    %18 = arith.divf %7, %17 : vector<8x256xf32>
    %cst_12 = arith.constant 9.900000e-01 : f32
    %19 = vector.broadcast %cst_12 : f32 to vector<8x256xf32>
    %20 = arith.cmpf ogt, %18, %19 : vector<8x256xf32>
    %21 = arith.extui %20 : vector<8x256xi1> to vector<8x256xi32>
    %22 = arith.sitofp %21 : vector<8x256xi32> to vector<8x256xf32>
    %cst_13 = arith.constant 0.00999999977 : f32
    %23 = vector.broadcast %cst_13 : f32 to vector<8x256xf32>
    %24 = arith.cmpf olt, %18, %23 : vector<8x256xf32>
    %25 = arith.extui %24 : vector<8x256xi1> to vector<8x256xi32>
    %26 = arith.sitofp %25 : vector<8x256xi32> to vector<8x256xf32>
    %27 = arith.addf %22, %26 : vector<8x256xf32>
    %cst_14 = arith.constant dense<0.000000e+00> : vector<8x256xf32>
    %28 = tpu.matmul %3, %5, %cst_14 {dimension_numbers = #tpu.dot_dimension_numbers<[1], [0], [0], [1], [0, 0, 1, 1], [], []>} : vector<8x32xf32>, vector<32x256xf32>, vector<8x256xf32> -> vector<8x256xf32>
    %cst_15 = arith.constant 5.000000e-01 : f32
    %29 = vector.broadcast %cst_15 : f32 to vector<8x256xf32>
    %30 = arith.mulf %29, %28 : vector<8x256xf32>
    %31 = math.absf %30 : vector<8x256xf32>
    %cst_16 = arith.constant 0.000000e+00 : f32
    %32 = vector.broadcast %cst_16 : f32 to vector<8x256xf32>
    %33 = arith.subf %32, %31 : vector<8x256xf32>
    %34 = math.exp %33 : vector<8x256xf32>
    %35 = math.log1p %34 : vector<8x256xf32>
    %cst_17 = arith.constant 0.000000e+00 : f32
    %36 = vector.broadcast %cst_17 : f32 to vector<8x256xf32>
    %37 = arith.maximumf %30, %36 : vector<8x256xf32>
    %38 = arith.addf %35, %37 : vector<8x256xf32>
    %39 = arith.mulf %18, %30 : vector<8x256xf32>
    %40 = arith.subf %38, %39 : vector<8x256xf32>
    %cst_18 = arith.constant 3.200000e+01 : f32
    %41 = vector.broadcast %cst_18 : f32 to vector<8x256xf32>
    %42 = arith.addf %30, %41 : vector<8x256xf32>
    %cst_19 = arith.constant 2.000000e+00 : f32
    %43 = vector.broadcast %cst_19 : f32 to vector<8x256xf32>
    %44 = arith.mulf %43, %18 : vector<8x256xf32>
    %cst_20 = arith.constant 3.200000e+01 : f32
    %45 = vector.broadcast %cst_20 : f32 to vector<8x256xf32>
    %46 = arith.mulf %44, %45 : vector<8x256xf32>
    %47 = arith.subf %42, %46 : vector<8x256xf32>
    %48 = arith.mulf %47, %47 : vector<8x256xf32>
    %49 = arith.mulf %27, %40 : vector<8x256xf32>
    %cst_21 = arith.constant 1.000000e+00 : f32
    %50 = vector.broadcast %cst_21 : f32 to vector<8x256xf32>
    %51 = arith.subf %50, %27 : vector<8x256xf32>
    %cst_22 = arith.constant 1.000000e-01 : f32
    %52 = vector.broadcast %cst_22 : f32 to vector<8x256xf32>
    %53 = arith.mulf %52, %51 : vector<8x256xf32>
    %54 = arith.mulf %53, %48 : vector<8x256xf32>
    %55 = arith.addf %49, %54 : vector<8x256xf32>
    %c1_i32 = arith.constant 1 : i32
    %56 = arith.muli %arg0, %c1_i32 : i32
    %57 = arith.addi %56, %arg1 : i32
    %c256_i32 = arith.constant 256 : i32
    %58 = arith.muli %57, %c256_i32 : i32
    %59 = tpu.iota {dimensions = array<i32: 1>} : vector<8x256xi32>
    %60 = vector.broadcast %58 : i32 to vector<8x256xi32>
    %61 = arith.addi %60, %59 : vector<8x256xi32>
    %c320_i32 = arith.constant 320 : i32
    %62 = vector.broadcast %c320_i32 : i32 to vector<8x256xi32>
    %63 = arith.cmpi slt, %61, %62 : vector<8x256xi32>
    %cst_23 = arith.constant 0.000000e+00 : f32
    %64 = vector.broadcast %cst_23 : f32 to vector<8x256xf32>
    %65 = arith.select %63, %55, %64 : vector<8x256xi1>, vector<8x256xf32>
    %c0_24 = arith.constant 0 : index
    %c0_25 = arith.constant 0 : index
    %66 = vector.load %arg8[%c0_24, %c0_25] : memref<8x256xf32, #tpu.memory_space<vmem>>, vector<8x256xf32>
    %67 = arith.addf %66, %65 : vector<8x256xf32>
    %c0_26 = arith.constant 0 : index
    %c0_27 = arith.constant 0 : index
    %68 = vector.load %arg8[%c0_26, %c0_27] : memref<8x256xf32, #tpu.memory_space<vmem>>, vector<8x256xf32>
    tpu.vector_store %arg8[%c0_26, %c0_27], %67 {strides = array<i32>} : memref<8x256xf32, #tpu.memory_space<vmem>>, vector<8x256xf32>,
    %c0_i32_28 = arith.constant 0 : i32
    %69 = arith.cmpi eq, %arg1, %c0_i32_28 : i32
    %70 = arith.extui %69 : i1 to i32
    %c0_i32_29 = arith.constant 0 : i32
    %71 = arith.cmpi ne, %70, %c0_i32_29 : i32
    scf.if %71 {
      %c0_30 = arith.constant 0 : index
      %c0_31 = arith.constant 0 : index
      %72 = vector.load %arg8[%c0_30, %c0_31] : memref<8x256xf32, #tpu.memory_space<vmem>>, vector<8x256xf32>
      %73 = vector.shape_cast %72 : vector<8x256xf32> to vector<1x8x256xf32>
      %cst_32 = arith.constant dense<0.000000e+00> : vector<1xf32>
      %74 = vector.multi_reduction <add>, %73, %cst_32 [1, 2] : vector<1x8x256xf32> to vector<1xf32>
      %75 = vector.shape_cast %74 : vector<1xf32> to vector<1x1x1xf32>
      %76 = vector.extract %75[0, 0, 0] : f32 from vector<1x1x1xf32>
      %77 = vector.broadcast %76 : f32 to vector<1x8x128xf32>
      %c0_33 = arith.constant 0 : index
      %c0_34 = arith.constant 0 : index
      %c0_35 = arith.constant 0 : index
      %78 = vector.load %arg7[%c0_33, %c0_34, %c0_35] : memref<1x8x128xf32, #tpu.memory_space<vmem>>, vector<1x8x128xf32>
      tpu.vector_store %arg7[%c0_33, %c0_34, %c0_35], %77 {strides = array<i32>} : memref<1x8x128xf32, #tpu.memory_space<vmem>>, vector<1x8x128xf32>,
    } else {
    }
    return
  }
  func.func @transform_0(%arg0: i32, %arg1: i32) -> (i32, i32) {
    %c0_i32 = arith.constant 0 : i32
    %c0_i32_0 = arith.constant 0 : i32
    %c0_i32_1 = arith.constant 0 : i32
    return %c0_i32, %c0_i32_0 : i32, i32
  }
  func.func @transform_1(%arg0: i32, %arg1: i32) -> (i32, i32) {
    %c0_i32 = arith.constant 0 : i32
    %c0_i32_0 = arith.constant 0 : i32
    %c0_i32_1 = arith.constant 0 : i32
    return %c0_i32, %c0_i32_0 : i32, i32
  }
  func.func @transform_2(%arg0: i32, %arg1: i32) -> (i32, i32) {
    %c0_i32 = arith.constant 0 : i32
    %c0_i32_0 = arith.constant 0 : i32
    %c0_i32_1 = arith.constant 0 : i32
    return %c0_i32, %c0_i32_0 : i32, i32
  }
  func.func @transform_3(%arg0: i32, %arg1: i32) -> (i32, i32) {
    %c1_i32 = arith.constant 1 : i32
    %0 = arith.muli %arg0, %c1_i32 : i32
    %1 = arith.addi %0, %arg1 : i32
    %c0_i32 = arith.constant 0 : i32
    %c0_i32_0 = arith.constant 0 : i32
    return %c0_i32, %1 : i32, i32
  }
  func.func @transform_4(%arg0: i32, %arg1: i32) -> (i32, i32) {
    %c1_i32 = arith.constant 1 : i32
    %0 = arith.muli %arg0, %c1_i32 : i32
    %1 = arith.addi %0, %arg1 : i32
    %c0_i32 = arith.constant 0 : i32
    %c0_i32_0 = arith.constant 0 : i32
    return %c0_i32, %1 : i32, i32
  }
  func.func @transform_5(%arg0: i32, %arg1: i32) -> (i32, i32, i32) {
    %c0_i32 = arith.constant 0 : i32
    %c0_i32_0 = arith.constant 0 : i32
    %c0_i32_1 = arith.constant 0 : i32
    return %arg0, %c0_i32, %c0_i32_0 : i32, i32, i32
  }
}

</mosaic_0001>

<llo_original>
// kernel: tpu_custom_call.1
$region0: #{tpu_custom_call.1}
  #allocation0 [shape = 'u32[]', space=smem, size = 0x4, offset = 0x4, fixed_abs, tag = 'smem constant byte address 0x4 - core index']
  #allocation1 [shape = 'u32[144,128]{1,0:T(1,128)}', space=vmem, size = 0x12000, scoped, tag = 'internal scratch']
  #allocation2 [shape = 'f32[8,256]{1,0:T(8,128)}', space=vmem, size = 0x2000, scoped, tag = 'scratch operand']
  %s0 = inlined_call_operand.vmem [shape: f32[8,1], index: 0, kind: input, shape index: {}]
  %s1 = inlined_call_operand.vmem [shape: f32[8,32], index: 1, kind: input, shape index: {}]
  %s2 = inlined_call_operand.vmem [shape: f32[8,16], index: 2, kind: input, shape index: {}]
  %s3 = inlined_call_operand.hbm [shape: f32[32,512], index: 3, kind: input, shape index: {}]
  %s4 = inlined_call_operand.hbm [shape: f32[16,512], index: 4, kind: input, shape index: {}]
  %s5 = inlined_call_operand.hbm [shape: f32[2,8,128], index: 5, kind: output, shape index: {}]
  %s6 = sld [smem:[#allocation0]]
  $region69: #{tpu_custom_call.1} parent=0
    _
  %s8 = ssub.s32 1, %s6
  %s9 = scalar_select 0, %s8, %s6
  $region1: #{tpu_custom_call.1} parent=0
    #allocation3 [shape = 'u8[65536]{0}', space=vmem, size = 0x10000, scoped, tag = 'input window, operand 3']
    #allocation4 [shape = 's32[2]{0}', space=sflag, size = 0x8, scoped, tag = 'scoped memory for tpu_custom_call.1']
    #allocation5 [shape = 's32[2]{0}', space=sflag, size = 0x8, scoped, tag = 'scoped memory for tpu_custom_call.1']
    #allocation6 [shape = 'u8[32768]{0}', space=vmem, size = 0x8000, scoped, tag = 'input window, operand 4']
    #allocation7 [shape = 's32[2]{0}', space=sflag, size = 0x8, scoped, tag = 'scoped memory for tpu_custom_call.1']
    #allocation8 [shape = 'u8[8192]{0}', space=vmem, size = 0x2000, scoped, tag = 'output window, operand 0']
    %10 = vsyncpa [#allocation4], 0
    %s11 = scalar_lea.sflag [#allocation4], 1
    %12 = vsyncpa %s11, 0
    %13 = vsyncpa [#allocation7], 0
    %s14 = scalar_lea.sflag [#allocation7], 1
    %15 = vsyncpa %s14, 0
    %16 = vsyncpa [#allocation5], 0
    %s17 = scalar_lea.sflag [#allocation5], 1
    %18 = vsyncpa %s17, 0
    loop: start=0, step=1, limit=4
    $region2: #{tpu_custom_call.1} parent=1 // loop_pre_header
      _
    $region3: #{tpu_custom_call.1} parent=1 // loop_header
      %s20 = sphi 0, %s24
      %p21 = scmp.ge.s32.totalorder %s20, 4
      %s27 = sphi 0, %s39
      %s28 = sphi 0, %s35
      %s29 = sphi 0, %s27
      %s30 = sphi 0, %s28
      %s31 = sphi 0, %s29
      %s32 = sphi 0, %s30
      %s40 = sphi 0, %s40
      %s42 = sphi 0, %s40
      %s43 = sphi 0, %s42
      %s57 = sphi 0, %s43
      %s61 = sphi 0, %s61
      %s63 = sphi 0, %s61
      %s64 = sphi 0, %s63
      %s78 = sphi 0, %s64
      %s82 = sphi 0, %s82
      %s84 = sphi 0, %s82
      %s85 = sphi 0, %s84
      %s99 = sphi 0, %s85
      %s107 = sphi 0, %s109
      %s110 = sphi 0, %s107
      %s111 = sphi 0, %s110
      %s127 = sphi 0, %s111
      %s135 = sphi 0, %s137
      %s138 = sphi 0, %s135
      %s139 = sphi 0, %s138
      %s155 = sphi 0, %s139
      %s161 = sphi 0, %s163
      %s164 = sphi 0, %s161
      %s165 = sphi 0, %s164
      %s181 = sphi 0, %s165
    $region4: #{tpu_custom_call.1} parent=1 // loop_header_branch
      %23 = sbr.rel (%p21) target = $region8
    $region5: #{tpu_custom_call.1} parent=1 // loop_body
      %s25 = ssub.s32 %s20, 1
      %s26 = ssub.s32 %s20, 2
      %s33 = sadd.s32 1, %s28
      %p34 = scmp.ge.s32.totalorder %s33, 1
      %s35 = scalar_select %p34, 0, %s33
      %s36 = sadd.s32 1, %s27
      %s37 = scalar_select %p34, %s36, %s27
      %p38 = scmp.ge.s32.totalorder %s37, 2
      %s39 = scalar_select %p38, 0, %s37
      %s41 = sadd.s32 %s40, 1
      %p44 = scmp.eq.s32.totalorder %s20, 1
      %p45 = scmp.ne.s32.totalorder %s40, %s42
      %p46 = scmp.eq.s32.totalorder %s20, 0
      %p47 = por %p45, %p46
      %p48 = scmp.ne.s32.totalorder %s40, %s42
      %p49 = scmp.eq.s32.totalorder %s25, 1
      %p50 = por %p48, %p49
      %p51 = scmp.ne.s32.totalorder %s42, %s43
      %p52 = scmp.eq.s32.totalorder %s25, 0
      %p53 = por %p51, %p52
      %p54 = scmp.ne.s32.totalorder %s42, %s43
      %p55 = scmp.eq.s32.totalorder %s26, 1
      %p56 = por %p54, %p55
      %p58 = scmp.ne.s32.totalorder %s43, %s57
      %p59 = scmp.eq.s32.totalorder %s26, 0
      %p60 = por %p58, %p59
      %s62 = sadd.s32 %s61, 1
      %p65 = scmp.eq.s32.totalorder %s20, 1
      %p66 = scmp.ne.s32.totalorder %s61, %s63
      %p67 = scmp.eq.s32.totalorder %s20, 0
      %p68 = por %p66, %p67
      %p69 = scmp.ne.s32.totalorder %s61, %s63
      %p70 = scmp.eq.s32.totalorder %s25, 1
      %p71 = por %p69, %p70
      %p72 = scmp.ne.s32.totalorder %s63, %s64
      %p73 = scmp.eq.s32.totalorder %s25, 0
      %p74 = por %p72, %p73
      %p75 = scmp.ne.s32.totalorder %s63, %s64
      %p76 = scmp.eq.s32.totalorder %s26, 1
      %p77 = por %p75, %p76
      %p79 = scmp.ne.s32.totalorder %s64, %s78
      %p80 = scmp.eq.s32.totalorder %s26, 0
      %p81 = por %p79, %p80
      %s83 = sadd.s32 %s82, 1
      %p86 = scmp.eq.s32.totalorder %s20, 1
      %p87 = scmp.ne.s32.totalorder %s82, %s84
      %p88 = scmp.eq.s32.totalorder %s20, 0
      %p89 = por %p87, %p88
      %p90 = scmp.ne.s32.totalorder %s82, %s84
      %p91 = scmp.eq.s32.totalorder %s25, 1
      %p92 = por %p90, %p91
      %p93 = scmp.ne.s32.totalorder %s84, %s85
      %p94 = scmp.eq.s32.totalorder %s25, 0
      %p95 = por %p93, %p94
      %p96 = scmp.ne.s32.totalorder %s84, %s85
      %p97 = scmp.eq.s32.totalorder %s26, 1
      %p98 = por %p96, %p97
      %p100 = scmp.ne.s32.totalorder %s85, %s99
      %p101 = scmp.eq.s32.totalorder %s26, 0
      %p102 = por %p100, %p101
      %s103 = sadd.s32 %s27, %s28
      %s104 = sadd.s32 %s39, %s35
      %s105 = ssub.s32 %s103, %s104
      %p106 = scmp.eq.s32.totalorder %s105, 0
      %s108 = sadd.s32 %s107, 1
      %s109 = scalar_select %p106, %s107, %s108
      %p112 = pneg %p106
      %p113 = scmp.eq.s32.totalorder %s20, 1
      %p114 = por %p112, %p113
      %p115 = scmp.ne.s32.totalorder %s107, %s110
      %p116 = scmp.eq.s32.totalorder %s20, 0
      %p117 = por %p115, %p116
      %p118 = scmp.ne.s32.totalorder %s107, %s110
      %p119 = scmp.eq.s32.totalorder %s25, 1
      %p120 = por %p118, %p119
      %p121 = scmp.ne.s32.totalorder %s110, %s111
      %p122 = scmp.eq.s32.totalorder %s25, 0
      %p123 = por %p121, %p122
      %p124 = scmp.ne.s32.totalorder %s110, %s111
      %p125 = scmp.eq.s32.totalorder %s26, 1
      %p126 = por %p124, %p125
      %p128 = scmp.ne.s32.totalorder %s111, %s127
      %p129 = scmp.eq.s32.totalorder %s26, 0
      %p130 = por %p128, %p129
      %s131 = sadd.s32 %s27, %s28
      %s132 = sadd.s32 %s39, %s35
      %s133 = ssub.s32 %s131, %s132
      %p134 = scmp.eq.s32.totalorder %s133, 0
      %s136 = sadd.s32 %s135, 1
      %s137 = scalar_select %p134, %s135, %s136
      %p140 = pneg %p134
      %p141 = scmp.eq.s32.totalorder %s20, 1
      %p142 = por %p140, %p141
      %p143 = scmp.ne.s32.totalorder %s135, %s138
      %p144 = scmp.eq.s32.totalorder %s20, 0
      %p145 = por %p143, %p144
      %p146 = scmp.ne.s32.totalorder %s135, %s138
      %p147 = scmp.eq.s32.totalorder %s25, 1
      %p148 = por %p146, %p147
      %p149 = scmp.ne.s32.totalorder %s138, %s139
      %p150 = scmp.eq.s32.totalorder %s25, 0
      %p151 = por %p149, %p150
      %p152 = scmp.ne.s32.totalorder %s138, %s139
      %p153 = scmp.eq.s32.totalorder %s26, 1
      %p154 = por %p152, %p153
      %p156 = scmp.ne.s32.totalorder %s139, %s155
      %p157 = scmp.eq.s32.totalorder %s26, 0
      %p158 = por %p156, %p157
      %s159 = ssub.s32 %s27, %s39
      %p160 = scmp.eq.s32.totalorder %s159, 0
      %s162 = sadd.s32 %s161, 1
      %s163 = scalar_select %p160, %s161, %s162
      %p166 = pneg %p160
      %p167 = scmp.eq.s32.totalorder %s20, 1
      %p168 = por %p166, %p167
      %p169 = scmp.ne.s32.totalorder %s161, %s164
      %p170 = scmp.eq.s32.totalorder %s20, 0
      %p171 = por %p169, %p170
      %p172 = scmp.ne.s32.totalorder %s161, %s164
      %p173 = scmp.eq.s32.totalorder %s25, 1
      %p174 = por %p172, %p173
      %p175 = scmp.ne.s32.totalorder %s164, %s165
      %p176 = scmp.eq.s32.totalorder %s25, 0
      %p177 = por %p175, %p176
      %p178 = scmp.ne.s32.totalorder %s164, %s165
      %p179 = scmp.eq.s32.totalorder %s26, 1
      %p180 = por %p178, %p179
      %p182 = scmp.ne.s32.totalorder %s165, %s181
      %p183 = scmp.eq.s32.totalorder %s26, 0
      %p184 = por %p182, %p183
      %p185 = scmp.le.s32.totalorder 1, %s20
      %p186 = scmp.lt.s32.totalorder %s20, 3
      %p187 = pnand %p185, %p186
      %p188 = pneg %p187
      // Predicated region
      $region9: #{tpu_custom_call.1} parent=5 // pred_check
        _
      $region10: #{tpu_custom_call.1} parent=5 // pred_check_branch
        %190 = sbr.rel (%p187) target = $region12
      $region11: #{tpu_custom_call.1} parent=5 // pred_region
        %s191 = ssub.s32 %s20, 1
        // Predicated region
        $region13: #{tpu_custom_call.1} parent=11 // pred_check
          %p192 = pneg %p53
        $region14: #{tpu_custom_call.1} parent=11 // pred_check_branch
          %194 = sbr.rel (%p192) target = $region16
        $region15: #{tpu_custom_call.1} parent=11 // pred_region
          _
        $region16: #{tpu_custom_call.1} parent=11 // pred_fallthru
          _
        // Predicated region
        $region17: #{tpu_custom_call.1} parent=11 // pred_check
          %p195 = pneg %p74
        $region18: #{tpu_custom_call.1} parent=11 // pred_check_branch
          %197 = sbr.rel (%p195) target = $region20
        $region19: #{tpu_custom_call.1} parent=11 // pred_region
          _
        $region20: #{tpu_custom_call.1} parent=11 // pred_fallthru
          _
        // Predicated region
        $region21: #{tpu_custom_call.1} parent=11 // pred_check
          %p198 = pneg %p95
        $region22: #{tpu_custom_call.1} parent=11 // pred_check_branch
          %200 = sbr.rel (%p198) target = $region24
        $region23: #{tpu_custom_call.1} parent=11 // pred_region
          _
        $region24: #{tpu_custom_call.1} parent=11 // pred_fallthru
          _
      $region12: #{tpu_custom_call.1} parent=5 // pred_fallthru
        _
      %p201 = scmp.lt.s32.totalorder %s20, 2
      // Predicated region
      $region25: #{tpu_custom_call.1} parent=5 // pred_check
        %p202 = pneg %p201
      $region26: #{tpu_custom_call.1} parent=5 // pred_check_branch
        %204 = sbr.rel (%p202) target = $region28
      $region27: #{tpu_custom_call.1} parent=5 // pred_region
        // Predicated region
        $region29: #{tpu_custom_call.1} parent=27 // pred_check
          %p205 = pneg %p117
        $region30: #{tpu_custom_call.1} parent=27 // pred_check_branch
          %207 = sbr.rel (%p205) target = $region32
        $region31: #{tpu_custom_call.1} parent=27 // pred_region
          %s208 = sand.u32 %s107, 1
          %s209 = scalar_lea.sflag [#allocation4], %s208
          %s210 = sand.u32 %s107, 1
          %s211 = smul.addr %s210, 64
          %s212 = scalar_lea.vmem [#allocation3], %s211
          %s213 = sadd.s32 %s27, %s28
          %s214 = smul.u32 2, %s213
          %s216 = ssub.s32 1024, 1024
          %217 = vsyncadd %s209, %s216
          %s218 = smul.addr %s214, 128
          %s219 = scalar_lea.hbm %s3, %s218
          %s220 = sshll.u32 %s212, 4
          %s221 = int_to_ptr.vmem [resolvable:$true] %s220
          %226 = dma.hbm_to_vmem [thread:$0]  %s219, 1024, %s221, %s209, 512, 256, 16
        $region32: #{tpu_custom_call.1} parent=27 // pred_fallthru
          _
        // Predicated region
        $region33: #{tpu_custom_call.1} parent=27 // pred_check
          %p227 = pneg %p145
        $region34: #{tpu_custom_call.1} parent=27 // pred_check_branch
          %229 = sbr.rel (%p227) target = $region36
        $region35: #{tpu_custom_call.1} parent=27 // pred_region
          %s230 = sand.u32 %s135, 1
          %s231 = scalar_lea.sflag [#allocation7], %s230
          %s232 = sand.u32 %s135, 1
          %s233 = smul.addr %s232, 32
          %s234 = scalar_lea.vmem [#allocation6], %s233
          %s235 = sadd.s32 %s27, %s28
          %s236 = smul.u32 2, %s235
          %s238 = ssub.s32 512, 512
          %239 = vsyncadd %s231, %s238
          %s240 = smul.addr %s236, 128
          %s241 = scalar_lea.hbm %s4, %s240
          %s242 = sshll.u32 %s234, 4
          %s243 = int_to_ptr.vmem [resolvable:$true] %s242
          %248 = dma.hbm_to_vmem [thread:$0]  %s241, 512, %s243, %s231, 512, 256, 16
        $region36: #{tpu_custom_call.1} parent=27 // pred_fallthru
          _
      $region28: #{tpu_custom_call.1} parent=5 // pred_fallthru
        _
      %p249 = scmp.le.s32.totalorder 1, %s20
      %p250 = scmp.lt.s32.totalorder %s20, 3
      %p251 = pnand %p249, %p250
      %p252 = pneg %p251
      // Predicated region
      $region37: #{tpu_custom_call.1} parent=5 // pred_check
        _
      $region38: #{tpu_custom_call.1} parent=5 // pred_check_branch
        %254 = sbr.rel (%p251) target = $region40
      $region39: #{tpu_custom_call.1} parent=5 // pred_region
        %s255 = ssub.s32 %s20, 1
        %s256 = sand.u32 %s110, 1
        %s257 = scalar_lea.sflag [#allocation4], %s256
        %s258 = sand.u32 %s110, 1
        %s259 = smul.addr %s258, 64
        %s260 = scalar_lea.vmem [#allocation3], %s259
        // Predicated region
        $region41: #{tpu_custom_call.1} parent=39 // pred_check
          %p261 = pneg %p123
        $region42: #{tpu_custom_call.1} parent=39 // pred_check_branch
          %263 = sbr.rel (%p261) target = $region44
        $region43: #{tpu_custom_call.1} parent=39 // pred_region
          %264 = dma.done %s257, 1024
        $region44: #{tpu_custom_call.1} parent=39 // pred_fallthru
          _
        %s265 = sand.u32 %s138, 1
        %s266 = scalar_lea.sflag [#allocation7], %s265
        %s267 = sand.u32 %s138, 1
        %s268 = smul.addr %s267, 32
        %s269 = scalar_lea.vmem [#allocation6], %s268
        // Predicated region
        $region45: #{tpu_custom_call.1} parent=39 // pred_check
          %p270 = pneg %p151
        $region46: #{tpu_custom_call.1} parent=39 // pred_check_branch
          %272 = sbr.rel (%p270) target = $region48
        $region47: #{tpu_custom_call.1} parent=39 // pred_region
          %273 = dma.done %s266, 512
        $region48: #{tpu_custom_call.1} parent=39 // pred_fallthru
          _
        %p274 = pneg %p53
        %p275 = pneg %p50
        %p276 = pneg %p74
        %p277 = pneg %p71
        %p278 = pneg %p95
        %p279 = pneg %p92
        %s280 = sand.u32 %s110, 1
        %s281 = scalar_lea.sflag [#allocation4], %s280
        %s282 = sand.u32 %s110, 1
        %s283 = smul.addr %s282, 64
        %s284 = scalar_lea.vmem [#allocation3], %s283
        %p285 = pneg %p123
        %p286 = pneg %p120
        %s287 = sand.u32 %s138, 1
        %s288 = scalar_lea.sflag [#allocation7], %s287
        %s289 = sand.u32 %s138, 1
        %s290 = smul.addr %s289, 32
        %s291 = scalar_lea.vmem [#allocation6], %s290
        %p292 = pneg %p151
        %p293 = pneg %p148
        %p294 = pneg %p177
        %p295 = pneg %p174
        %s296 = sand.u32 %s164, 1
        %s297 = scalar_lea.sflag [#allocation5], %s296
        %s298 = sand.u32 %s164, 1
        %s299 = smul.addr %s298, 8
        %s300 = scalar_lea.vmem [#allocation8], %s299
        %s301 = sadd.s32 %s29, %s30
        %s302 = smul.u32 2, %s301
        %s303 = sadd.s32 %s29, %s30
        %s304 = smul.u32 2, %s303
        %p305 = scmp.eq.s32.totalorder %s30, 0
        // Predicated region
        $region49: #{tpu_custom_call.1} parent=39 // pred_check
          %p306 = pneg %p305
        $region50: #{tpu_custom_call.1} parent=39 // pred_check_branch
          %308 = sbr.rel (%p306) target = $region52
        $region51: #{tpu_custom_call.1} parent=39 // pred_region
          %309 = vst [vmem:[#allocation2] sm:$0xff] 0.0
          %310 = vst [vmem:[#allocation2 + $0x8] sm:$0xff] 0.0
        $region52: #{tpu_custom_call.1} parent=39 // pred_fallthru
          _
        %v311 = vld [vmem:[%s1] sm:$0xff]
        %v312 = vld [vmem:[%s2] sm:$0xff]
        %v313 = vld [vmem:[%s260] sm:$0xff]
        %v314 = vld [vmem:[%s260 + $0x8] sm:$0xff]
        %v315 = vld [vmem:[%s260 + $0x10] sm:$0xff]
        %v316 = vld [vmem:[%s260 + $0x18] sm:$0xff]
        %v317 = vld [vmem:[%s260 + $0x20] sm:$0xff]
        %v318 = vld [vmem:[%s260 + $0x28] sm:$0xff]
        %v319 = vld [vmem:[%s260 + $0x30] sm:$0xff]
        %v320 = vld [vmem:[%s260 + $0x38] sm:$0xff]
        %v321 = vld [vmem:[%s269] sm:$0xff]
        %v322 = vld [vmem:[%s269 + $0x8] sm:$0xff]
        %v323 = vld [vmem:[%s269 + $0x10] sm:$0xff]
        %v324 = vld [vmem:[%s269 + $0x18] sm:$0xff]
        %vm325 = vcmask 130048
        %v327 = vsel %vm325, %v312, 0
        %329 = vmatprep.subr.mxu0 %v322
        %330 = vmatpush1.msra.mxu0 %v321
        %331 = vmatprep.subr.mxu0 %v324
        %332 = vmatpush1.msra.mxu0 %v323
        %333 = vmatprep.subr.mxu0 0.0
        %334 = vmatpush1.msra.mxu0 0.0
        %335 = vmatprep.subr.mxu0 0.0
        %336 = vmatpush1.msra.mxu0 0.0
        %337 = vmatprep.subr.mxu0 0.0
        %338 = vmatpush1.msra.mxu0 0.0
        %339 = vmatprep.subr.mxu0 0.0
        %340 = vmatpush1.msra.mxu0 0.0
        %341 = vmatprep.subr.mxu0 0.0
        %342 = vmatpush1.msra.mxu0 0.0
        %343 = vmatprep.subr.mxu0 0.0
        %344 = vmatpush1.msra.mxu0 0.0
        %345 = vmatprep.subr.mxu0 0.0
        %346 = vmatpush1.msra.mxu0 0.0
        %347 = vmatprep.subr.mxu0 0.0
        %348 = vmatpush1.msra.mxu0 0.0
        %349 = vmatprep.subr.mxu0 0.0
        %350 = vmatpush1.msra.mxu0 0.0
        %351 = vmatprep.subr.mxu0 0.0
        %352 = vmatpush1.msra.mxu0 0.0
        %353 = vmatprep.subr.mxu0 0.0
        %354 = vmatpush1.msra.mxu0 0.0
        %355 = vmatprep.subr.mxu0 0.0
        %356 = vmatpush1.msra.mxu0 0.0
        %357 = vmatprep.subr.mxu0 0.0
        %358 = vmatpush1.msra.mxu0 0.0
        %359 = vmatprep.subr.mxu0 0.0
        %360 = vmatpush1.msra.mxu0 0.0
        %361 = vmatprep.subr.mxu0 0.0
        %362 = vmatpush1.msra.mxu0 0.0
        %363 = vmatprep.subr.mxu0 0.0
        %364 = vmatpush1.msra.mxu0 0.0
        %365 = vmatprep.subr.mxu0 0.0
        %366 = vmatpush1.msra.mxu0 0.0
        %367 = vmatprep.subr.mxu0 0.0
        %368 = vmatpush1.msra.mxu0 0.0
        %369 = vmatprep.subr.mxu0 0.0
        %370 = vmatpush1.msra.mxu0 0.0
        %371 = vmatprep.subr.mxu0 0.0
        %372 = vmatpush1.msra.mxu0 0.0
        %373 = vmatprep.subr.mxu0 0.0
        %374 = vmatpush1.msra.mxu0 0.0
        %375 = vmatprep.subr.mxu0 0.0
        %376 = vmatpush1.msra.mxu0 0.0
        %377 = vmatprep.subr.mxu0 0.0
        %378 = vmatpush1.msra.mxu0 0.0
        %379 = vmatprep.subr.mxu0 0.0
        %380 = vmatpush1.msra.mxu0 0.0
        %381 = vmatprep.subr.mxu0 0.0
        %382 = vmatpush1.msra.mxu0 0.0
        %383 = vmatprep.subr.mxu0 0.0
        %384 = vmatpush1.msra.mxu0 0.0
        %385 = vmatprep.subr.mxu0 0.0
        %386 = vmatpush1.msra.mxu0 0.0
        %387 = vmatprep.subr.mxu0 0.0
        %388 = vmatpush1.msra.mxu0 0.0
        %389 = vmatprep.subr.mxu0 0.0
        %390 = vmatpush1.msra.mxu0 0.0
        %391 = vmatprep.subr.mxu0 0.0
        %392 = vmatpush1.msra.mxu0 0.0
        %393 = vmatprep.mubr.f32.mxu0 0.0
        %394 = vmatmul.mubr.f32.gmra.mrb[0].mxu0 %v327
        %v395 = vpop.f32.mrb[0].mxu0
        %v396 = vadd.f32 0.0, %v395
        %v397 = vpop.f32.mrb[0].mxu0
        %v398 = vadd.f32 0.0, %v397
        %399 = vdwg.mxu0
        %v400 = vmul.f32 %v321, %v321
        %v401 = vmul.f32 %v322, %v322
        %v402 = vmul.f32 %v323, %v323
        %v403 = vmul.f32 %v324, %v324
        %v404 = vadd.f32 %v400, %v402
        %v405 = vrot.slane %v404, 4
        %v406 = vadd.f32 %v404, %v405
        %v407 = vrot.slane %v406, 2
        %v408 = vadd.f32 %v406, %v407
        %v409 = vrot.slane %v408, 1
        %v410 = vadd.f32 %v408, %v409
        %v411 = vadd.f32 %v401, %v403
        %v412 = vrot.slane %v411, 4
        %v413 = vadd.f32 %v411, %v412
        %v414 = vrot.slane %v413, 2
        %v415 = vadd.f32 %v413, %v414
        %v416 = vrot.slane %v415, 1
        %v417 = vadd.f32 %v415, %v416
        %v418 = vrsqrt.pop %v410
        %v419 = vmul.f32 %v410, %v418
        %vm420 = vcmp.eq.f32.partialorder %v410, inf
        %v421 = vsel %vm420, %v410, %v419
        %vm422 = vcmp.eq.f32.partialorder %v410, 0.0
        %v423 = vand.u32 %v410, 2147483648
        %v424 = vsel %vm422, %v423, %v421
        %v425 = vrsqrt.pop %v417
        %v426 = vmul.f32 %v417, %v425
        %vm427 = vcmp.eq.f32.partialorder %v417, inf
        %v428 = vsel %vm427, %v417, %v426
        %vm429 = vcmp.eq.f32.partialorder %v417, 0.0
        %v430 = vand.u32 %v417, 2147483648
        %v431 = vsel %vm429, %v430, %v428
        %v432 = vld [vmem:[%s0] sm:$0xff]
        %434 = vset.pattern.permute.xlu0 0
        %435 = vperm.xlu0 %434, %v432
        %v436 = vpop.permute.xlu0 %435
        %v438 = vmul.f32 %v436, %v424
        %v439 = vmul.f32 %v436, %v431
        %v440 = vadd.f32 %v438, 1e-05
        %v441 = vadd.f32 %v439, 1e-05
        %v442 = vrcp.pop %v440
        %v443 = vmul.f32 %v396, %v442
        %v444 = vrcp.pop %v441
        %v445 = vmul.f32 %v398, %v444
        %vm446 = vcmp.gt.f32.partialorder %v443, 0.99
        %vm447 = vcmp.gt.f32.partialorder %v445, 0.99
        %v448 = vsel %vm446, 1, 0
        %v449 = vsel %vm447, 1, 0
        %v450 = vcvt.s32.f32 %v448
        %v451 = vcvt.s32.f32 %v449
        %vm452 = vcmp.lt.f32.partialorder %v443, 0.01
        %vm453 = vcmp.lt.f32.partialorder %v445, 0.01
        %v454 = vsel %vm452, 1, 0
        %v455 = vsel %vm453, 1, 0
        %v456 = vcvt.s32.f32 %v454
        %v457 = vcvt.s32.f32 %v455
        %v458 = vadd.f32 %v450, %v456
        %v459 = vadd.f32 %v451, %v457
        %vm460 = vcmask 261120
        %v462 = vsel %vm460, %v311, 0
        %464 = vmatprep.subr.mxu0 %v314
        %465 = vmatpush1.msra.mxu0 %v313
        %466 = vmatprep.subr.mxu0 %v316
        %467 = vmatpush1.msra.mxu0 %v315
        %468 = vmatprep.subr.mxu0 %v318
        %469 = vmatpush1.msra.mxu0 %v317
        %470 = vmatprep.subr.mxu0 %v320
        %471 = vmatpush1.msra.mxu0 %v319
        %472 = vmatprep.subr.mxu0 0.0
        %473 = vmatpush1.msra.mxu0 0.0
        %474 = vmatprep.subr.mxu0 0.0
        %475 = vmatpush1.msra.mxu0 0.0
        %476 = vmatprep.subr.mxu0 0.0
        %477 = vmatpush1.msra.mxu0 0.0
        %478 = vmatprep.subr.mxu0 0.0
        %479 = vmatpush1.msra.mxu0 0.0
        %480 = vmatprep.subr.mxu0 0.0
        %481 = vmatpush1.msra.mxu0 0.0
        %482 = vmatprep.subr.mxu0 0.0
        %483 = vmatpush1.msra.mxu0 0.0
        %484 = vmatprep.subr.mxu0 0.0
        %485 = vmatpush1.msra.mxu0 0.0
        %486 = vmatprep.subr.mxu0 0.0
        %487 = vmatpush1.msra.mxu0 0.0
        %488 = vmatprep.subr.mxu0 0.0
        %489 = vmatpush1.msra.mxu0 0.0
        %490 = vmatprep.subr.mxu0 0.0
        %491 = vmatpush1.msra.mxu0 0.0
        %492 = vmatprep.subr.mxu0 0.0
        %493 = vmatpush1.msra.mxu0 0.0
        %494 = vmatprep.subr.mxu0 0.0
        %495 = vmatpush1.msra.mxu0 0.0
        %496 = vmatprep.subr.mxu0 0.0
        %497 = vmatpush1.msra.mxu0 0.0
        %498 = vmatprep.subr.mxu0 0.0
        %499 = vmatpush1.msra.mxu0 0.0
        %500 = vmatprep.subr.mxu0 0.0
        %501 = vmatpush1.msra.mxu0 0.0
        %502 = vmatprep.subr.mxu0 0.0
        %503 = vmatpush1.msra.mxu0 0.0
        %504 = vmatprep.subr.mxu0 0.0
        %505 = vmatpush1.msra.mxu0 0.0
        %506 = vmatprep.subr.mxu0 0.0
        %507 = vmatpush1.msra.mxu0 0.0
        %508 = vmatprep.subr.mxu0 0.0
        %509 = vmatpush1.msra.mxu0 0.0
        %510 = vmatprep.subr.mxu0 0.0
        %511 = vmatpush1.msra.mxu0 0.0
        %512 = vmatprep.subr.mxu0 0.0
        %513 = vmatpush1.msra.mxu0 0.0
        %514 = vmatprep.subr.mxu0 0.0
        %515 = vmatpush1.msra.mxu0 0.0
        %516 = vmatprep.subr.mxu0 0.0
        %517 = vmatpush1.msra.mxu0 0.0
        %518 = vmatprep.subr.mxu0 0.0
        %519 = vmatpush1.msra.mxu0 0.0
        %520 = vmatprep.subr.mxu0 0.0
        %521 = vmatpush1.msra.mxu0 0.0
        %522 = vmatprep.subr.mxu0 0.0
        %523 = vmatpush1.msra.mxu0 0.0
        %524 = vmatprep.subr.mxu0 0.0
        %525 = vmatpush1.msra.mxu0 0.0
        %526 = vmatprep.subr.mxu0 0.0
        %527 = vmatpush1.msra.mxu0 0.0
        %528 = vmatprep.mubr.f32.mxu0 0.0
        %529 = vmatmul.mubr.f32.gmra.mrb[0].mxu0 %v462
        %v530 = vpop.f32.mrb[0].mxu0
        %v531 = vadd.f32 0.0, %v530
        %v532 = vpop.f32.mrb[0].mxu0
        %v533 = vadd.f32 0.0, %v532
        %534 = vdwg.mxu0
        %v535 = vmul.f32 %v531, 0.5
        %v536 = vmul.f32 %v533, 0.5
        %v537 = vand.u32 2147483647, %v535
        %v538 = vand.u32 2147483647, %v536
        %v539 = vsub.f32 0.0, %v537
        %v540 = vsub.f32 0.0, %v538
        %v541 = vmul.f32 %v539, 1.442695
        %v542 = vpow.pop %v541
        %v543 = vmul.f32 %v540, 1.442695
        %v544 = vpow.pop %v543
        %v545 = vadd.f32 %v542, 1.0
        %v546 = vlog2.pop %v545
        %v547 = vmul.f32 %v546, 0.6931472
        %v548 = vmul.f32 -0.5, %v542
        %v549 = vadd.f32 %v548, 1.0
        %v550 = vmul.f32 %v549, %v542
        %v551 = vand.u32 2147483647, %v542
        %vm552 = vcmp.lt.f32.partialorder %v551, 0.0004427343
        %v553 = vsel %vm552, %v550, %v547
        %v554 = vadd.f32 %v544, 1.0
        %v555 = vlog2.pop %v554
        %v556 = vmul.f32 %v555, 0.6931472
        %v557 = vmul.f32 -0.5, %v544
        %v558 = vadd.f32 %v557, 1.0
        %v559 = vmul.f32 %v558, %v544
        %v560 = vand.u32 2147483647, %v544
        %vm561 = vcmp.lt.f32.partialorder %v560, 0.0004427343
        %v562 = vsel %vm561, %v559, %v556
        %v563 = vmax.f32 %v535, 0.0
        %v564 = vmax.f32 %v536, 0.0
        %v565 = vadd.f32 %v553, %v563
        %v566 = vadd.f32 %v562, %v564
        %v567 = vmul.f32 %v443, %v535
        %v568 = vmul.f32 %v445, %v536
        %v569 = vsub.f32 %v565, %v567
        %v570 = vsub.f32 %v566, %v568
        %v571 = vadd.f32 %v535, 32.0
        %v572 = vadd.f32 %v536, 32.0
        %v573 = vmul.f32 %v443, 2.0
        %v574 = vmul.f32 %v445, 2.0
        %v575 = vmul.f32 %v573, 32.0
        %v576 = vmul.f32 %v574, 32.0
        %v577 = vsub.f32 %v571, %v575
        %v578 = vsub.f32 %v572, %v576
        %v579 = vmul.f32 %v577, %v577
        %v580 = vmul.f32 %v578, %v578
        %v581 = vmul.f32 %v458, %v569
        %v582 = vmul.f32 %v459, %v570
        %v583 = vsub.f32 1.0, %v458
        %v584 = vsub.f32 1.0, %v459
        %v585 = vmul.f32 %v583, 0.1
        %v586 = vmul.f32 %v584, 0.1
        %v587 = vmul.f32 %v585, %v579
        %v588 = vmul.f32 %v586, %v580
        %v589 = vadd.f32 %v581, %v587
        %v590 = vadd.f32 %v582, %v588
        %s591 = sadd.s32 %s29, %s30
        %s592 = smul.u32 %s591, 256
        %v593 = vlaneseq
        %v594 = vand.u32 %v593, 127
        %v595 = vadd.s32 %v594, 128
        %v596 = vstv %s592
        %v597 = vadd.s32 %v596, %v594
        %v598 = vadd.s32 %v596, %v595
        %vm599 = vcmp.lt.s32.totalorder %v597, 320
        %vm600 = vcmp.lt.s32.totalorder %v598, 320
        %v601 = vsel %vm599, %v589, 0.0
        %v602 = vsel %vm600, %v590, 0.0
        %v603 = vld [vmem:[#allocation2] sm:$0xff]
        %v604 = vld [vmem:[#allocation2 + $0x8] sm:$0xff]
        %v605 = vadd.f32 %v603, %v601
        %v606 = vadd.f32 %v604, %v602
        %607 = vst [vmem:[#allocation2] sm:$0xff] %v605
        %608 = vst [vmem:[#allocation2 + $0x8] sm:$0xff] %v606
        // Predicated region
        $region53: #{tpu_custom_call.1} parent=39 // pred_check
          %p609 = pneg %p305
        $region54: #{tpu_custom_call.1} parent=39 // pred_check_branch
          %611 = sbr.rel (%p609) target = $region56
        $region55: #{tpu_custom_call.1} parent=39 // pred_region
          %v612 = vld [vmem:[#allocation2] sm:$0xff]
          %v613 = vld [vmem:[#allocation2 + $0x8] sm:$0xff]
          %v614 = vadd.f32 %v612, %v613
          %615 = vadd.xlane.f32.xlu0 %v614
          %v616 = vpop.xlane.xlu0 %615
          %v617 = vrot.slane %v616, 4
          %v618 = vadd.f32 %v616, %v617
          %v619 = vrot.slane %v618, 2
          %v620 = vadd.f32 %v618, %v619
          %v621 = vrot.slane %v620, 1
          %v622 = vadd.f32 %v620, %v621
          %s623 = vtos %v622
          %v624 = vstv %s623
          %625 = vst [vmem:[%s300] sm:$0xff] %v624
        $region56: #{tpu_custom_call.1} parent=39 // pred_fallthru
          _
        %s626 = sand.u32 %s164, 1
        %s627 = scalar_lea.sflag [#allocation5], %s626
        %s628 = sand.u32 %s164, 1
        %s629 = smul.addr %s628, 8
        %s630 = scalar_lea.vmem [#allocation8], %s629
        // Predicated region
        $region57: #{tpu_custom_call.1} parent=39 // pred_check
          %p631 = pneg %p174
        $region58: #{tpu_custom_call.1} parent=39 // pred_check_branch
          %633 = sbr.rel (%p631) target = $region60
        $region59: #{tpu_custom_call.1} parent=39 // pred_region
          %s635 = ssub.s32 128, 128
          %636 = vsyncadd %s627, %s635
          %s637 = smul.addr %s29, 128
          %s638 = scalar_lea.hbm %s5, %s637
          %s640 = sshll.u32 %s630, 4
          %s641 = int_to_ptr.vmem [resolvable:$true] %s640
          %643 = dma.vmem_to_hbm [thread:$0]  %s641, 128, %s638, %s627
        $region60: #{tpu_custom_call.1} parent=39 // pred_fallthru
          _
      $region40: #{tpu_custom_call.1} parent=5 // pred_fallthru
        _
      %p644 = scmp.le.s32.totalorder 2, %s20
      // Predicated region
      $region61: #{tpu_custom_call.1} parent=5 // pred_check
        %p645 = pneg %p644
      $region62: #{tpu_custom_call.1} parent=5 // pred_check_branch
        %647 = sbr.rel (%p645) target = $region64
      $region63: #{tpu_custom_call.1} parent=5 // pred_region
        %s648 = ssub.s32 %s20, 2
        // Predicated region
        $region65: #{tpu_custom_call.1} parent=63 // pred_check
          %p649 = pneg %p180
        $region66: #{tpu_custom_call.1} parent=63 // pred_check_branch
          %651 = sbr.rel (%p649) target = $region68
        $region67: #{tpu_custom_call.1} parent=63 // pred_region
          %s652 = sand.u32 %s165, 1
          %s653 = scalar_lea.sflag [#allocation5], %s652
          %s654 = sand.u32 %s165, 1
          %s655 = smul.addr %s654, 8
          %s656 = scalar_lea.vmem [#allocation8], %s655
          %657 = dma.done %s653, 128
        $region68: #{tpu_custom_call.1} parent=63 // pred_fallthru
          _
      $region64: #{tpu_custom_call.1} parent=5 // pred_fallthru
        _
    $region6: #{tpu_custom_call.1} parent=1 // loop_footer
      %s24 = sadd.s32 1, %s20
    $region7: #{tpu_custom_call.1} parent=1 // loop_footer_branch
      %19 = sbr.rel target = $region3
    $region8: #{tpu_custom_call.1} parent=1 // loop_exit
      _
    %658 = vsyncpa [#allocation4], 1
    %s659 = scalar_lea.sflag [#allocation4], 1
    %660 = vsyncpa %s659, 1
    %661 = vsyncpa [#allocation7], 1
    %s662 = scalar_lea.sflag [#allocation7], 1
    %663 = vsyncpa %s662, 1
    %664 = vsyncpa [#allocation5], 1
    %s665 = scalar_lea.sflag [#allocation5], 1
    %666 = vsyncpa %s665, 1

</llo_original>
